<compile_context>
chip_gen: v5e
topology: v5e:2x2
jax: 0.10.0
libtpu: 0.0.40
codegen_flags: <defaults>
</compile_context>

<pallas_src>
import functools

import jax
import jax.numpy as jnp
from jax.experimental import pallas as pl
from jax.experimental.pallas import tpu as pltpu

LANE = 128


def _round_up(v, m):
    return (v + m - 1) // m * m


def _vmem_limit(block_bytes):
    # Per-generation scoped-VMEM budget: <= 3/4 of physical VMEM (64 MiB on v7x,
    # 128 MiB on v5e/v6e), never less than the double-buffered blocks need.
    phys = 64 * 1024 * 1024
    try:
        phys = int(pltpu.get_tpu_info().vmem_capacity_bytes)
    except Exception:
        pass
    cap = (phys * 3) // 4
    want = block_bytes + 8 * 1024 * 1024
    return int(max(min(max(want, 32 * 1024 * 1024), cap), 16 * 1024 * 1024))


def _pick_two(Wo, Cout):
    # Output-width column tile.  Bounds the banded weight size / wasted MXU rows
    # (useful-FLOP density ~ KW/(TWo+KW-1)) while keeping the output lane-dense
    # (TWo*Cout lanes per tile, target <= ~512 unless Cout alone exceeds that).
    target = max(512, Cout)
    best = 1
    for d in range(1, Wo + 1):
        if Wo % d == 0 and d * Cout <= target:
            best = d
    return best


def _pick_th(Ho, lt_p, outer_points):
    # Largest divisor of Ho (multiple of 16 so bf16 output blocks stay on native
    # sublane packing) whose f32 dot result stays modest; then shrink only if the
    # grid would otherwise have too few points for 2 TensorCores + pipelining.
    budget_rows = min(256, max(16, (256 * 1024) // (lt_p * 4)))
    divs = [d for d in range(Ho, 0, -1) if Ho % d == 0]
    aligned = [d for d in divs if d % 16 == 0]
    cands = aligned if aligned else [Ho]
    th = next((d for d in cands if d <= budget_rows), cands[-1])
    idx = cands.index(th)
    while outer_points * (Ho // th) < 8 and idx + 1 < len(cands):
        idx += 1
        th = cands[idx]
    return th


# ------------------------- conv (+ fused BN stats) kernel -------------------------
def _conv_kernel(x_ref, m_ref, y_ref, stats_ref, *, KH, TH, aligned):
    """One (batch, column-tile, H-tile) grid point.

    x_ref:     (1, 1, Hp, LB_p)     f32  -- this tile's input band, rows on sublanes,
                                            (w_in, Cin) flattened onto lanes.
    m_ref:     (KH*LB_p, LT_p)      bf16 -- banded weight, KH taps concatenated along K.
    y_ref:     (1, 1, TH, LT_p)     bf16 -- conv output rows (lane-dense).
    stats_ref: (1, 1, 8, LT_p)      f32  -- rows 0/1 = per-lane sum / sum-of-squares
                                            (full 8-sublane slab -> unmasked store).
    """
    t = pl.program_id(2)
    h0 = t * TH
    if aligned:
        h0 = pl.multiple_of(h0, 8)

    # KH shifted row windows concatenated along lanes -> ONE matmul with K=KH*LB_p
    # (fills the 256-deep MXU on v6e/v7x, single result pop).  bf16 cast happens once
    # on the gathered window; accumulation is f32 on the MXU.
    parts = [x_ref[0, 0, pl.ds(h0 + kh, TH), :] for kh in range(KH)]
    rows = jnp.concatenate(parts, axis=-1).astype(jnp.bfloat16)      # (TH, KH*LB_p)
    acc = jnp.dot(rows, m_ref[...], preferred_element_type=jnp.float32)  # (TH, LT_p)

    # bf16 activation traffic to HBM; BN statistics come from the f32 accumulator.
    y_ref[0, 0] = acc.astype(y_ref.dtype)
    stats_ref[0, 0] = jnp.concatenate(
        [jnp.sum(acc, axis=0, keepdims=True),
         jnp.sum(acc * acc, axis=0, keepdims=True),
         jnp.zeros((6, acc.shape[-1]), jnp.float32)], axis=0)


# ---------------------------- affine (+ ReLU) kernel -------------------------------
def _affine_relu_kernel(y_ref, scale_ref, shift_ref, o_ref, *, relu):
    y = y_ref[0, 0].astype(jnp.float32)                  # (Ho, LT_p), f32 math
    out = y * scale_ref[...] + shift_ref[...]
    if relu:
        out = jnp.maximum(out, 0.0)
    o_ref[0, 0] = out.astype(o_ref.dtype)                # bf16 back to HBM (in place)


# ----------------------------------- wrapper ---------------------------------------
def basic_conv_forward(x_nchw, w_oihw, gamma, beta, *, padding=0, eps=1e-5,
                       relu=True, bn=True, packed_output=False):
    """BasicConv forward: Conv2d(stride=1, dilation=1, groups=1, bias=False)
    -> BatchNorm2d (training-mode batch statistics) -> ReLU.

    packed_output=True returns the lane-dense (N, CT, Ho, TWo*Cout padded) bf16
    activation (for chaining lane-dense consumers without an NCHW round trip)."""
    # TODO(synk): stride/dilation/groups other than the module defaults (1,1,1), a conv
    # bias, and the BatchNorm running_mean/var momentum update (module *state*, not part
    # of the forward value) are not implemented.
    N, Cin, H, W = x_nchw.shape
    Cout, Cin_w, KH, KW = w_oihw.shape
    assert Cin == Cin_w
    Hp, Wp = H + 2 * padding, W + 2 * padding
    Ho, Wo = Hp - KH + 1, Wp - KW + 1

    TWo = _pick_two(Wo, Cout)
    CT = Wo // TWo
    WB = TWo + KW - 1                       # input-column band per output tile
    LB, LT = WB * Cin, TWo * Cout
    LB_p, LT_p = _round_up(LB, LANE), _round_up(LT, LANE)
    TH = _pick_th(Ho, LT_p, N * CT)
    HT = Ho // TH

    # ---- input glue (plain JAX): NCHW -> column-tiled lane-dense (N, CT, Hp, LB_p) ----
    x = jnp.transpose(x_nchw, (0, 2, 3, 1)).astype(jnp.float32)
    x = jnp.pad(x, ((0, 0), (padding, padding), (padding, padding), (0, 0)))
    win = (jnp.arange(CT) * TWo)[:, None] + jnp.arange(WB)[None, :]   # (CT, WB)
    xb = jnp.transpose(x[:, :, win, :], (0, 2, 1, 3, 4)).reshape(N, CT, Hp, LB)
    xb = jnp.pad(xb, ((0, 0), (0, 0), (0, 0), (0, LB_p - LB)))

    # ---- banded conv weight (shared by every column tile), KH taps stacked along K ----
    # m[kh*LB_p + wi*Cin + ci, wo*Cout + co] = W[co, ci, kh, wi - wo] if 0<=wi-wo<KW.
    w_t = jnp.transpose(w_oihw, (2, 3, 1, 0)).astype(jnp.float32)     # (KH,KW,Cin,Cout)
    dw = jnp.arange(WB)[:, None] - jnp.arange(TWo)[None, :]           # (WB, TWo)
    valid = ((dw >= 0) & (dw < KW)).astype(jnp.float32)
    m = w_t[:, jnp.clip(dw, 0, KW - 1)] * valid[None, :, :, None, None]
    m = jnp.transpose(m, (0, 1, 3, 2, 4)).reshape(KH, LB, LT)
    m = jnp.pad(m, ((0, 0), (0, LB_p - LB), (0, LT_p - LT)))
    m = m.reshape(KH * LB_p, LT_p).astype(jnp.bfloat16)

    conv = functools.partial(_conv_kernel, KH=KH, TH=TH, aligned=(TH % 8 == 0))
    conv_block_bytes = (2 * Hp * LB_p * 4 + 2 * KH * LB_p * LT_p * 2
                        + 2 * TH * LT_p * 2 + 2 * 8 * LT_p * 4)
    y, stats = pl.pallas_call(
        conv,
        out_shape=(jax.ShapeDtypeStruct((N, CT, Ho, LT_p), jnp.bfloat16),
                   jax.ShapeDtypeStruct((N, CT * HT, 8, LT_p), jnp.float32)),
        grid=(N, CT, HT),
        in_specs=[
            pl.BlockSpec((1, 1, Hp, LB_p), lambda n, c, t: (n, c, 0, 0)),  # resident over t
            pl.BlockSpec((KH * LB_p, LT_p), lambda n, c, t: (0, 0)),       # resident weight
        ],
        out_specs=(
            pl.BlockSpec((1, 1, TH, LT_p), lambda n, c, t: (n, c, t, 0)),
            pl.BlockSpec((1, 1, 8, LT_p), lambda n, c, t: (n, c * HT + t, 0, 0)),
        ),
        compiler_params=pltpu.CompilerParams(
            dimension_semantics=("parallel", "parallel", "parallel"),
            vmem_limit_bytes=_vmem_limit(conv_block_bytes)),
        cost_estimate=pl.CostEstimate(
            flops=2 * N * CT * Ho * (KH * LB_p) * LT_p,
            transcendentals=0,
            bytes_accessed=int(xb.size * 4 + m.size * 2
                               + N * CT * Ho * LT_p * 2 + N * CT * HT * 8 * LT_p * 4)),
    )(xb, m)

    if bn or relu:
        if bn:
            # Finish the batch statistics on a tiny tensor (plain-JAX glue).
            s = jnp.sum(stats, axis=(0, 1))                         # (8, LT_p)
            s = s[0:2, :LT].reshape(2, TWo, Cout).sum(axis=1)       # (2, Cout)
            count = N * Ho * Wo
            mean = s[0] / count
            var = s[1] / count - mean * mean        # biased variance (training forward)
            scale = gamma.astype(jnp.float32) * jax.lax.rsqrt(var + eps)
            shift = beta.astype(jnp.float32) - mean * scale
        else:
            scale = jnp.ones((Cout,), jnp.float32)
            shift = jnp.zeros((Cout,), jnp.float32)
        # Broadcast the per-channel affine to the flattened (TWo*Cout) lane layout.
        scale_l = jnp.pad(jnp.tile(scale, TWo), (0, LT_p - LT)).reshape(1, LT_p)
        shift_l = jnp.pad(jnp.tile(shift, TWo), (0, LT_p - LT)).reshape(1, LT_p)

        aff = functools.partial(_affine_relu_kernel, relu=relu)
        aff_block_bytes = 2 * (2 * Ho * LT_p * 2 + 2 * LT_p * 4)
        y = pl.pallas_call(
            aff,
            out_shape=jax.ShapeDtypeStruct((N, CT, Ho, LT_p), jnp.bfloat16),
            grid=(N, CT),
            in_specs=[
                pl.BlockSpec((1, 1, Ho, LT_p), lambda n, c: (n, c, 0, 0)),  # full-height
                pl.BlockSpec((1, LT_p), lambda n, c: (0, 0)),
                pl.BlockSpec((1, LT_p), lambda n, c: (0, 0)),
            ],
            out_specs=pl.BlockSpec((1, 1, Ho, LT_p), lambda n, c: (n, c, 0, 0)),
            input_output_aliases={0: 0},                 # normalize in place (bf16)
            compiler_params=pltpu.CompilerParams(
                dimension_semantics=("parallel", "parallel"),
                vmem_limit_bytes=_vmem_limit(aff_block_bytes)),
            cost_estimate=pl.CostEstimate(
                flops=3 * N * CT * Ho * LT_p, transcendentals=0,
                bytes_accessed=int(2 * N * CT * Ho * LT_p * 2)),
        )(y, scale_l, shift_l)

    if packed_output:
        # y[n, c, h, wo*Cout + co] == out[n, co, h, c*TWo + wo]; bf16, lane-dense.
        return y

    # ---- output glue (single XLA fusion on bf16 data): -> NCHW f32 (PyTorch layout) ----
    out = y[..., :LT].reshape(N, CT, Ho, TWo, Cout)
    out = jnp.transpose(out, (0, 4, 2, 1, 3)).reshape(N, Cout, Ho, Wo)
    return out.astype(jnp.float32)


# ----------------------------------- reference --------------------------------------
def _reference(x_nchw, w_oihw, gamma, beta, *, padding, eps=1e-5):
    # Mirror the kernel's numerics: bf16-rounded conv inputs, f32 conv/BN math,
    # bf16 storage of the conv activation and of the affine output.
    xb = x_nchw.astype(jnp.bfloat16).astype(jnp.float32)
    wb = w_oihw.astype(jnp.bfloat16).astype(jnp.float32)
    y = jax.lax.conv_general_dilated(
        xb, wb, window_strides=(1, 1),
        padding=((padding, padding), (padding, padding)),
        dimension_numbers=("NCHW", "OIHW", "NCHW"))
    mean = jnp.mean(y, axis=(0, 2, 3), keepdims=True)
    var = jnp.mean((y - mean) ** 2, axis=(0, 2, 3), keepdims=True)
    yq = y.astype(jnp.bfloat16).astype(jnp.float32)
    out = (yq - mean) * jax.lax.rsqrt(var + eps)
    out = out * gamma.reshape(1, -1, 1, 1) + beta.reshape(1, -1, 1, 1)
    out = jnp.maximum(out, 0.0)
    return out.astype(jnp.bfloat16).astype(jnp.float32)


if __name__ == "__main__":
    base_key = jax.random.PRNGKey(0)

    def run_case(case_id, N, Cin, H, W, Cout, K, padding):
        ks = jax.random.split(jax.random.fold_in(base_key, case_id), 4)
        x = jax.random.normal(ks[0], (N, Cin, H, W), dtype=jnp.float32)
        w = jax.random.normal(ks[1], (Cout, Cin, K, K), dtype=jnp.float32) * 0.1
        gamma = jax.random.normal(ks[2], (Cout,), dtype=jnp.float32) * 0.1 + 1.0
        beta = jax.random.normal(ks[3], (Cout,), dtype=jnp.float32) * 0.1

        fwd = jax.jit(functools.partial(basic_conv_forward, padding=padding))
        out = jax.block_until_ready(fwd(x, w, gamma, beta))
        ref = _reference(x, w, gamma, beta, padding=padding)
        assert out.shape == (N, Cout, H + 2 * padding - K + 1,
                             W + 2 * padding - K + 1), out.shape
        err = float(jnp.max(jnp.abs(out - ref)))
        assert err < 3e-2, err

    # BasicConv(in_planes=4, out_planes=8, kernel_size=3, stride=1, padding=1,
    #           relu=True, bn=True, bias=False)
    run_case(0, N=2, Cin=4, H=16, W=16, Cout=8, K=3, padding=1)
    # Wider case exercising the general path: column tiling (CT=2) + multiple H tiles.
    run_case(1, N=2, Cin=3, H=48, W=48, Cout=16, K=3, padding=1)
    print("KERNEL_OK")
</pallas_src>

<mosaic_0001>
module attributes {stable_mosaic.version = 11 : i64} {
  func.func @_conv_kernel(%arg0: i32, %arg1: i32, %arg2: i32, %arg3: memref<1x1x18x128xf32, #tpu.memory_space<vmem>>, %arg4: memref<384x128xbf16, #tpu.memory_space<vmem>>, %arg5: memref<1x1x16x128xbf16, #tpu.memory_space<vmem>>, %arg6: memref<1x1x8x128xf32, #tpu.memory_space<vmem>>) attributes {dimension_semantics = [#tpu.dimension_semantics<parallel>, #tpu.dimension_semantics<parallel>, #tpu.dimension_semantics<parallel>], iteration_bounds = array<i64: 2, 1, 1>, scalar_prefetch = 0 : i64, scratch_operands = 0 : i64, tpu.core_type = #tpu.core_type<tc>, window_params = [{transform_indices = @transform_0, window_bounds = array<i64: 1, 1, 18, 128>}, {pipeline_mode = #tpu.pipeline_mode<synchronous>, transform_indices = @transform_1, window_bounds = array<i64: 384, 128>}, {transform_indices = @transform_2, window_bounds = array<i64: 1, 1, 16, 128>}, {transform_indices = @transform_3, window_bounds = array<i64: 1, 1, 8, 128>}]} {
    %c16_i32 = arith.constant 16 : i32
    %0 = arith.muli %arg2, %c16_i32 : i32
    %1 = tpu.assume_multiple %0, 8 : i32
    %c0_i32 = arith.constant 0 : i32
    %2 = arith.addi %1, %c0_i32 : i32
    %c0 = arith.constant 0 : index
    %c0_0 = arith.constant 0 : index
    %3 = arith.index_cast %2 : i32 to index
    %c0_1 = arith.constant 0 : index
    %4 = vector.load %arg3[%c0, %c0_0, %3, %c0_1] : memref<1x1x18x128xf32, #tpu.memory_space<vmem>>, vector<1x1x16x128xf32>
    %5 = vector.shape_cast %4 : vector<1x1x16x128xf32> to vector<16x128xf32>
    %c1_i32 = arith.constant 1 : i32
    %6 = arith.addi %1, %c1_i32 : i32
    %c0_2 = arith.constant 0 : index
    %c0_3 = arith.constant 0 : index
    %7 = arith.index_cast %6 : i32 to index
    %c0_4 = arith.constant 0 : index
    %8 = vector.load %arg3[%c0_2, %c0_3, %7, %c0_4] : memref<1x1x18x128xf32, #tpu.memory_space<vmem>>, vector<1x1x16x128xf32>
    %9 = vector.shape_cast %8 : vector<1x1x16x128xf32> to vector<16x128xf32>
    %c2_i32 = arith.constant 2 : i32
    %10 = arith.addi %1, %c2_i32 : i32
    %c0_5 = arith.constant 0 : index
    %c0_6 = arith.constant 0 : index
    %11 = arith.index_cast %10 : i32 to index
    %c0_7 = arith.constant 0 : index
    %12 = vector.load %arg3[%c0_5, %c0_6, %11, %c0_7] : memref<1x1x18x128xf32, #tpu.memory_space<vmem>>, vector<1x1x16x128xf32>
    %13 = vector.shape_cast %12 : vector<1x1x16x128xf32> to vector<16x128xf32>
    %14 = tpu.concatenate %5, %9, %13 in 1 : vector<16x128xf32>, vector<16x128xf32>, vector<16x128xf32> -> vector<16x384xf32>
    %15 = arith.truncf %14 : vector<16x384xf32> to vector<16x384xbf16>
    %c0_8 = arith.constant 0 : index
    %c0_9 = arith.constant 0 : index
    %16 = vector.load %arg4[%c0_8, %c0_9] : memref<384x128xbf16, #tpu.memory_space<vmem>>, vector<384x128xbf16>
    %cst = arith.constant dense<0.000000e+00> : vector<16x128xf32>
    %17 = tpu.matmul %15, %16, %cst {dimension_numbers = #tpu.dot_dimension_numbers<[1], [0], [0], [1], [0, 0, 1, 1], [], []>} : vector<16x384xbf16>, vector<384x128xbf16>, vector<16x128xf32> -> vector<16x128xf32>
    %18 = arith.truncf %17 : vector<16x128xf32> to vector<16x128xbf16>
    %c0_10 = arith.constant 0 : index
    %c0_11 = arith.constant 0 : index
    %c0_12 = arith.constant 0 : index
    %c0_13 = arith.constant 0 : index
    %19 = vector.load %arg5[%c0_10, %c0_11, %c0_12, %c0_13] : memref<1x1x16x128xbf16, #tpu.memory_space<vmem>>, vector<1x1x16x128xbf16>
    %20 = vector.shape_cast %19 : vector<1x1x16x128xbf16> to vector<16x128xbf16>
    %21 = vector.shape_cast %18 : vector<16x128xbf16> to vector<1x1x16x128xbf16>
    tpu.vector_store %arg5[%c0_10, %c0_11, %c0_12, %c0_13], %21 {strides = array<i32>} : memref<1x1x16x128xbf16, #tpu.memory_space<vmem>>, vector<1x1x16x128xbf16>,
    %cst_14 = arith.constant dense<0.000000e+00> : vector<128xf32>
    %22 = vector.multi_reduction <add>, %17, %cst_14 [0] : vector<16x128xf32> to vector<128xf32>
    %23 = vector.shape_cast %22 : vector<128xf32> to vector<1x128xf32>
    %24 = arith.mulf %17, %17 : vector<16x128xf32>
    %cst_15 = arith.constant dense<0.000000e+00> : vector<128xf32>
    %25 = vector.multi_reduction <add>, %24, %cst_15 [0] : vector<16x128xf32> to vector<128xf32>
    %26 = vector.shape_cast %25 : vector<128xf32> to vector<1x128xf32>
    %cst_16 = arith.constant 0.000000e+00 : f32
    %27 = vector.broadcast %cst_16 : f32 to vector<6x128xf32>
    %28 = tpu.concatenate %23, %26, %27 in 0 : vector<1x128xf32>, vector<1x128xf32>, vector<6x128xf32> -> vector<8x128xf32>
    %c0_17 = arith.constant 0 : index
    %c0_18 = arith.constant 0 : index
    %c0_19 = arith.constant 0 : index
    %c0_20 = arith.constant 0 : index
    %29 = vector.load %arg6[%c0_17, %c0_18, %c0_19, %c0_20] : memref<1x1x8x128xf32, #tpu.memory_space<vmem>>, vector<1x1x8x128xf32>
    %30 = vector.shape_cast %29 : vector<1x1x8x128xf32> to vector<8x128xf32>
    %31 = vector.shape_cast %28 : vector<8x128xf32> to vector<1x1x8x128xf32>
    tpu.vector_store %arg6[%c0_17, %c0_18, %c0_19, %c0_20], %31 {strides = array<i32>} : memref<1x1x8x128xf32, #tpu.memory_space<vmem>>, vector<1x1x8x128xf32>,
    return
  }
  func.func @transform_0(%arg0: i32, %arg1: i32, %arg2: i32) -> (i32, i32, i32, i32) {
    %c0_i32 = arith.constant 0 : i32
    %c0_i32_0 = arith.constant 0 : i32
    %c0_i32_1 = arith.constant 0 : i32
    return %arg0, %arg1, %c0_i32, %c0_i32_0 : i32, i32, i32, i32
  }
  func.func @transform_1(%arg0: i32, %arg1: i32, %arg2: i32) -> (i32, i32) {
    %c0_i32 = arith.constant 0 : i32
    %c0_i32_0 = arith.constant 0 : i32
    %c0_i32_1 = arith.constant 0 : i32
    return %c0_i32, %c0_i32_0 : i32, i32
  }
  func.func @transform_2(%arg0: i32, %arg1: i32, %arg2: i32) -> (i32, i32, i32, i32) {
    %c0_i32 = arith.constant 0 : i32
    %c0_i32_0 = arith.constant 0 : i32
    return %arg0, %arg1, %arg2, %c0_i32 : i32, i32, i32, i32
  }
  func.func @transform_3(%arg0: i32, %arg1: i32, %arg2: i32) -> (i32, i32, i32, i32) {
    %c1_i32 = arith.constant 1 : i32
    %0 = arith.muli %arg1, %c1_i32 : i32
    %1 = arith.addi %0, %arg2 : i32
    %c0_i32 = arith.constant 0 : i32
    %c0_i32_0 = arith.constant 0 : i32
    %c0_i32_1 = arith.constant 0 : i32
    return %arg0, %1, %c0_i32, %c0_i32_0 : i32, i32, i32, i32
  }
}

module attributes {stable_mosaic.version = 11 : i64} {
  func.func @_affine_relu_kernel(%arg0: i32, %arg1: i32, %arg2: memref<1x1x16x128xbf16, #tpu.memory_space<vmem>>, %arg3: memref<1x128xf32, #tpu.memory_space<vmem>>, %arg4: memref<1x128xf32, #tpu.memory_space<vmem>>, %arg5: memref<1x1x16x128xbf16, #tpu.memory_space<vmem>>) attributes {dimension_semantics = [#tpu.dimension_semantics<parallel>, #tpu.dimension_semantics<parallel>], iteration_bounds = array<i64: 2, 1>, scalar_prefetch = 0 : i64, scratch_operands = 0 : i64, tpu.core_type = #tpu.core_type<tc>, window_params = [{transform_indices = @transform_0, window_bounds = array<i64: 1, 1, 16, 128>}, {pipeline_mode = #tpu.pipeline_mode<synchronous>, transform_indices = @transform_1, window_bounds = array<i64: 1, 128>}, {pipeline_mode = #tpu.pipeline_mode<synchronous>, transform_indices = @transform_2, window_bounds = array<i64: 1, 128>}, {transform_indices = @transform_3, window_bounds = array<i64: 1, 1, 16, 128>}]} {
    %c0 = arith.constant 0 : index
    %c0_0 = arith.constant 0 : index
    %c0_1 = arith.constant 0 : index
    %c0_2 = arith.constant 0 : index
    %0 = vector.load %arg2[%c0, %c0_0, %c0_1, %c0_2] : memref<1x1x16x128xbf16, #tpu.memory_space<vmem>>, vector<1x1x16x128xbf16>
    %1 = vector.shape_cast %0 : vector<1x1x16x128xbf16> to vector<16x128xbf16>
    %2 = arith.extf %1 : vector<16x128xbf16> to vector<16x128xf32>
    %c0_3 = arith.constant 0 : index
    %c0_4 = arith.constant 0 : index
    %3 = vector.load %arg3[%c0_3, %c0_4] : memref<1x128xf32, #tpu.memory_space<vmem>>, vector<1x128xf32>
    %4 = vector.broadcast %3 : vector<1x128xf32> to vector<16x128xf32>
    %5 = arith.mulf %2, %4 : vector<16x128xf32>
    %c0_5 = arith.constant 0 : index
    %c0_6 = arith.constant 0 : index
    %6 = vector.load %arg4[%c0_5, %c0_6] : memref<1x128xf32, #tpu.memory_space<vmem>>, vector<1x128xf32>
    %7 = vector.broadcast %6 : vector<1x128xf32> to vector<16x128xf32>
    %8 = arith.addf %5, %7 : vector<16x128xf32>
    %cst = arith.constant 0.000000e+00 : f32
    %9 = vector.broadcast %cst : f32 to vector<16x128xf32>
    %10 = arith.maximumf %8, %9 : vector<16x128xf32>
    %11 = arith.truncf %10 : vector<16x128xf32> to vector<16x128xbf16>
    %c0_7 = arith.constant 0 : index
    %c0_8 = arith.constant 0 : index
    %c0_9 = arith.constant 0 : index
    %c0_10 = arith.constant 0 : index
    %12 = vector.load %arg5[%c0_7, %c0_8, %c0_9, %c0_10] : memref<1x1x16x128xbf16, #tpu.memory_space<vmem>>, vector<1x1x16x128xbf16>
    %13 = vector.shape_cast %12 : vector<1x1x16x128xbf16> to vector<16x128xbf16>
    %14 = vector.shape_cast %11 : vector<16x128xbf16> to vector<1x1x16x128xbf16>
    tpu.vector_store %arg5[%c0_7, %c0_8, %c0_9, %c0_10], %14 {strides = array<i32>} : memref<1x1x16x128xbf16, #tpu.memory_space<vmem>>, vector<1x1x16x128xbf16>,
    return
  }
  func.func @transform_0(%arg0: i32, %arg1: i32) -> (i32, i32, i32, i32) {
    %c0_i32 = arith.constant 0 : i32
    %c0_i32_0 = arith.constant 0 : i32
    %c0_i32_1 = arith.constant 0 : i32
    return %arg0, %arg1, %c0_i32, %c0_i32_0 : i32, i32, i32, i32
  }
  func.func @transform_1(%arg0: i32, %arg1: i32) -> (i32, i32) {
    %c0_i32 = arith.constant 0 : i32
    %c0_i32_0 = arith.constant 0 : i32
    %c0_i32_1 = arith.constant 0 : i32
    return %c0_i32, %c0_i32_0 : i32, i32
  }
  func.func @transform_2(%arg0: i32, %arg1: i32) -> (i32, i32) {
    %c0_i32 = arith.constant 0 : i32
    %c0_i32_0 = arith.constant 0 : i32
    %c0_i32_1 = arith.constant 0 : i32
    return %c0_i32, %c0_i32_0 : i32, i32
  }
  func.func @transform_3(%arg0: i32, %arg1: i32) -> (i32, i32, i32, i32) {
    %c0_i32 = arith.constant 0 : i32
    %c0_i32_0 = arith.constant 0 : i32
    %c0_i32_1 = arith.constant 0 : i32
    return %arg0, %arg1, %c0_i32, %c0_i32_0 : i32, i32, i32, i32
  }
}

</mosaic_0001>

<llo_original>
// kernel: tile.13
$region0: #{tile.13}
  #allocation0 [shape = 's32[1]{0}', space=sflag, size = 0x4, scoped, tag = 'scoped memory for tile.13']
  %s0 = inlined_call_operand.vmem [shape: f32[8], index: 0, kind: input, shape index: {}]
  %s1 = inlined_call_operand.vmem [shape: f32[16,8], index: 1, kind: output, shape index: {}]
  // Predicated region
  $region2: #{tile.13} parent=0 // pred_check
    _
  $region3: #{tile.13} parent=0 // pred_check_branch
    %3 = sbr.rel (0) target = $region5
  $region4: #{tile.13} parent=0 // pred_region
    _
  $region5: #{tile.13} parent=0 // pred_fallthru
    _
  %v4 = vld [vmem:[%s0] ss:$0 sm:$0xff]
  %5 = vst [vmem:[%s1] sm:$0xff] %v4
  %s6 = scalar_lea.vmem %s1, 8
  %7 = vst [vmem:[%s6] sm:$0xff] %v4

// kernel: basic_conv_forward.2
$region0: #{basic_conv_forward.2}
  #allocation0 [shape = 'u32[]', space=smem, size = 0x4, offset = 0x4, fixed_abs, tag = 'smem constant byte address 0x4 - core index']
  #allocation1 [shape = 'u32[72,128]{1,0:T(1,128)}', space=vmem, size = 0x9000, scoped, tag = 'internal scratch']
  %s0 = inlined_call_operand.vmem [shape: f32[2,1,18,128], index: 0, kind: input, shape index: {}]
  %s1 = inlined_call_operand.vmem [shape: bf16[384,128], index: 1, kind: input, shape index: {}]
  %s2 = inlined_call_operand.vmem [shape: bf16[2,1,16,128], index: 2, kind: output, shape index: {0}]
  %s3 = inlined_call_operand.vmem [shape: f32[2,1,8,128], index: 3, kind: output, shape index: {1}]
  %4 = xla_tuple %s2, %s3
  %s5 = sld [smem:[#allocation0]]
  $region49: #{basic_conv_forward.2} parent=0
    _
  %s7 = ssub.s32 1, %s5
  %s8 = scalar_select 0, %s7, %s5
  loop: start=0, step=1, limit=4
  $region2: #{basic_conv_forward.2} parent=0 // loop_pre_header
    _
  $region3: #{basic_conv_forward.2} parent=0 // loop_header
    %s10 = sphi 0, %s14
    %p11 = scmp.ge.s32.totalorder %s10, 4
    %s17 = sphi 0, %s36
    %s18 = sphi 0, %s32
    %s19 = sphi 0, %s28
    %s20 = sphi 0, %s17
    %s21 = sphi 0, %s18
    %s22 = sphi 0, %s19
    %s23 = sphi 0, %s20
    %s24 = sphi 0, %s21
    %s25 = sphi 0, %s22
    %s41 = sphi 0, %s43
    %s44 = sphi 0, %s41
    %s45 = sphi 0, %s44
    %s61 = sphi 0, %s45
    %s65 = sphi 0, %s65
    %s67 = sphi 0, %s65
    %s68 = sphi 0, %s67
    %s82 = sphi 0, %s68
    %s92 = sphi 0, %s94
    %s95 = sphi 0, %s92
    %s96 = sphi 0, %s95
    %s112 = sphi 0, %s96
    %s122 = sphi 0, %s124
    %s125 = sphi 0, %s122
    %s126 = sphi 0, %s125
    %s142 = sphi 0, %s126
  $region4: #{basic_conv_forward.2} parent=0 // loop_header_branch
    %13 = sbr.rel (%p11) target = $region8
  $region5: #{basic_conv_forward.2} parent=0 // loop_body
    %s15 = ssub.s32 %s10, 1
    %s16 = ssub.s32 %s10, 2
    %s26 = sadd.s32 1, %s19
    %p27 = scmp.ge.s32.totalorder %s26, 1
    %s28 = scalar_select %p27, 0, %s26
    %s29 = sadd.s32 1, %s18
    %s30 = scalar_select %p27, %s29, %s18
    %p31 = scmp.ge.s32.totalorder %s30, 1
    %s32 = scalar_select %p31, 0, %s30
    %s33 = sadd.s32 1, %s17
    %s34 = scalar_select %p31, %s33, %s17
    %p35 = scmp.ge.s32.totalorder %s34, 2
    %s36 = scalar_select %p35, 0, %s34
    %s37 = ssub.s32 %s17, %s36
    %s38 = ssub.s32 %s18, %s32
    %s39 = sor.u32 %s37, %s38
    %p40 = scmp.eq.s32.totalorder %s39, 0
    %s42 = sadd.s32 %s41, 1
    %s43 = scalar_select %p40, %s41, %s42
    %p46 = pneg %p40
    %p47 = scmp.eq.s32.totalorder %s10, 1
    %p48 = por %p46, %p47
    %p49 = scmp.ne.s32.totalorder %s41, %s44
    %p50 = scmp.eq.s32.totalorder %s10, 0
    %p51 = por %p49, %p50
    %p52 = scmp.ne.s32.totalorder %s41, %s44
    %p53 = scmp.eq.s32.totalorder %s15, 1
    %p54 = por %p52, %p53
    %p55 = scmp.ne.s32.totalorder %s44, %s45
    %p56 = scmp.eq.s32.totalorder %s15, 0
    %p57 = por %p55, %p56
    %p58 = scmp.ne.s32.totalorder %s44, %s45
    %p59 = scmp.eq.s32.totalorder %s16, 1
    %p60 = por %p58, %p59
    %p62 = scmp.ne.s32.totalorder %s45, %s61
    %p63 = scmp.eq.s32.totalorder %s16, 0
    %p64 = por %p62, %p63
    %s66 = sadd.s32 %s65, 1
    %p69 = scmp.eq.s32.totalorder %s10, 1
    %p70 = scmp.ne.s32.totalorder %s65, %s67
    %p71 = scmp.eq.s32.totalorder %s10, 0
    %p72 = por %p70, %p71
    %p73 = scmp.ne.s32.totalorder %s65, %s67
    %p74 = scmp.eq.s32.totalorder %s15, 1
    %p75 = por %p73, %p74
    %p76 = scmp.ne.s32.totalorder %s67, %s68
    %p77 = scmp.eq.s32.totalorder %s15, 0
    %p78 = por %p76, %p77
    %p79 = scmp.ne.s32.totalorder %s67, %s68
    %p80 = scmp.eq.s32.totalorder %s16, 1
    %p81 = por %p79, %p80
    %p83 = scmp.ne.s32.totalorder %s68, %s82
    %p84 = scmp.eq.s32.totalorder %s16, 0
    %p85 = por %p83, %p84
    %s86 = ssub.s32 %s17, %s36
    %s87 = ssub.s32 %s18, %s32
    %s88 = sor.u32 %s86, %s87
    %s89 = ssub.s32 %s19, %s28
    %s90 = sor.u32 %s88, %s89
    %p91 = scmp.eq.s32.totalorder %s90, 0
    %s93 = sadd.s32 %s92, 1
    %s94 = scalar_select %p91, %s92, %s93
    %p97 = pneg %p91
    %p98 = scmp.eq.s32.totalorder %s10, 1
    %p99 = por %p97, %p98
    %p100 = scmp.ne.s32.totalorder %s92, %s95
    %p101 = scmp.eq.s32.totalorder %s10, 0
    %p102 = por %p100, %p101
    %p103 = scmp.ne.s32.totalorder %s92, %s95
    %p104 = scmp.eq.s32.totalorder %s15, 1
    %p105 = por %p103, %p104
    %p106 = scmp.ne.s32.totalorder %s95, %s96
    %p107 = scmp.eq.s32.totalorder %s15, 0
    %p108 = por %p106, %p107
    %p109 = scmp.ne.s32.totalorder %s95, %s96
    %p110 = scmp.eq.s32.totalorder %s16, 1
    %p111 = por %p109, %p110
    %p113 = scmp.ne.s32.totalorder %s96, %s112
    %p114 = scmp.eq.s32.totalorder %s16, 0
    %p115 = por %p113, %p114
    %s116 = sadd.s32 %s18, %s19
    %s117 = sadd.s32 %s32, %s28
    %s118 = ssub.s32 %s17, %s36
    %s119 = ssub.s32 %s116, %s117
    %s120 = sor.u32 %s118, %s119
    %p121 = scmp.eq.s32.totalorder %s120, 0
    %s123 = sadd.s32 %s122, 1
    %s124 = scalar_select %p121, %s122, %s123
    %p127 = pneg %p121
    %p128 = scmp.eq.s32.totalorder %s10, 1
    %p129 = por %p127, %p128
    %p130 = scmp.ne.s32.totalorder %s122, %s125
    %p131 = scmp.eq.s32.totalorder %s10, 0
    %p132 = por %p130, %p131
    %p133 = scmp.ne.s32.totalorder %s122, %s125
    %p134 = scmp.eq.s32.totalorder %s15, 1
    %p135 = por %p133, %p134
    %p136 = scmp.ne.s32.totalorder %s125, %s126
    %p137 = scmp.eq.s32.totalorder %s15, 0
    %p138 = por %p136, %p137
    %p139 = scmp.ne.s32.totalorder %s125, %s126
    %p140 = scmp.eq.s32.totalorder %s16, 1
    %p141 = por %p139, %p140
    %p143 = scmp.ne.s32.totalorder %s126, %s142
    %p144 = scmp.eq.s32.totalorder %s16, 0
    %p145 = por %p143, %p144
    %p146 = scmp.le.s32.totalorder 1, %s10
    %p147 = scmp.lt.s32.totalorder %s10, 3
    %p148 = pnand %p146, %p147
    %p149 = pneg %p148
    // Predicated region
    $region9: #{basic_conv_forward.2} parent=5 // pred_check
      _
    $region10: #{basic_conv_forward.2} parent=5 // pred_check_branch
      %151 = sbr.rel (%p148) target = $region12
    $region11: #{basic_conv_forward.2} parent=5 // pred_region
      %s152 = ssub.s32 %s10, 1
      // Predicated region
      $region13: #{basic_conv_forward.2} parent=11 // pred_check
        %p153 = pneg %p78
      $region14: #{basic_conv_forward.2} parent=11 // pred_check_branch
        %155 = sbr.rel (%p153) target = $region16
      $region15: #{basic_conv_forward.2} parent=11 // pred_region
        _
      $region16: #{basic_conv_forward.2} parent=11 // pred_fallthru
        _
    $region12: #{basic_conv_forward.2} parent=5 // pred_fallthru
      _
    %p156 = scmp.lt.s32.totalorder %s10, 2
    // Predicated region
    $region17: #{basic_conv_forward.2} parent=5 // pred_check
      %p157 = pneg %p156
    $region18: #{basic_conv_forward.2} parent=5 // pred_check_branch
      %159 = sbr.rel (%p157) target = $region20
    $region19: #{basic_conv_forward.2} parent=5 // pred_region
      // Predicated region
      $region21: #{basic_conv_forward.2} parent=19 // pred_check
        %p160 = pneg %p51
      $region22: #{basic_conv_forward.2} parent=19 // pred_check_branch
        %162 = sbr.rel (%p160) target = $region24
      $region23: #{basic_conv_forward.2} parent=19 // pred_region
        %p163 = scmp.lt.s32.totalorder %s17, 1
        %s164 = scalar_select %p163, %s17, 1
        %p165 = scmp.lt.s32.totalorder %s18, 0
        %s166 = scalar_select %p165, %s18, 0
        %s167 = smul.addr %s166, 3
        %s168 = smul.addr %s164, 3
        %s169 = sadd.s32 %s167, %s168
        %s170 = smul.addr %s169, 8
        %s171 = scalar_lea.vmem %s0, %s170
      $region24: #{basic_conv_forward.2} parent=19 // pred_fallthru
        _
    $region20: #{basic_conv_forward.2} parent=5 // pred_fallthru
      _
    %p172 = scmp.le.s32.totalorder 1, %s10
    %p173 = scmp.lt.s32.totalorder %s10, 3
    %p174 = pnand %p172, %p173
    %p175 = pneg %p174
    // Predicated region
    $region25: #{basic_conv_forward.2} parent=5 // pred_check
      _
    $region26: #{basic_conv_forward.2} parent=5 // pred_check_branch
      %177 = sbr.rel (%p174) target = $region28
    $region27: #{basic_conv_forward.2} parent=5 // pred_region
      %s178 = ssub.s32 %s10, 1
      %p179 = scmp.lt.s32.totalorder %s20, 1
      %s180 = scalar_select %p179, %s20, 1
      %p181 = scmp.lt.s32.totalorder %s21, 0
      %s182 = scalar_select %p181, %s21, 0
      %s183 = smul.addr %s182, 3
      %s184 = smul.addr %s180, 3
      %s185 = sadd.s32 %s183, %s184
      %s186 = smul.addr %s185, 8
      %s187 = scalar_lea.vmem %s0, %s186
      %p188 = pneg %p57
      %p189 = pneg %p54
      %p190 = pneg %p78
      %p191 = pneg %p75
      %p192 = pneg %p108
      %p193 = pneg %p105
      %s194 = smul.u32 2, %s22
      %p195 = scmp.lt.s32.totalorder %s20, 1
      %s196 = scalar_select %p195, %s20, 1
      %p197 = scmp.lt.s32.totalorder %s21, 0
      %s198 = scalar_select %p197, %s21, 0
      %p199 = scmp.lt.s32.totalorder %s194, 1
      %s200 = scalar_select %p199, %s194, 1
      %s201 = smul.addr %s198, 2
      %s202 = sadd.s32 %s200, %s201
      %s203 = smul.addr %s196, 2
      %s204 = sadd.s32 %s202, %s203
      %s205 = smul.addr %s204, 4
      %s206 = scalar_lea.vmem %s2, %s205
      %p207 = pneg %p138
      %p208 = pneg %p135
      %s209 = sadd.s32 %s21, %s22
      %p210 = scmp.lt.s32.totalorder %s20, 1
      %s211 = scalar_select %p210, %s20, 1
      %p212 = scmp.lt.s32.totalorder %s209, 0
      %s213 = scalar_select %p212, %s209, 0
      %s214 = sadd.s32 %s213, %s211
      %s215 = smul.addr %s214, 8
      %s216 = scalar_lea.vmem %s3, %s215
      %p217 = scmp.lt.s32.totalorder %s20, 1
      %s218 = scalar_select %p217, %s20, 1
      %p219 = scmp.lt.s32.totalorder %s21, 0
      %s220 = scalar_select %p219, %s21, 0
      %s221 = smul.addr %s220, 3
      %s222 = smul.addr %s218, 3
      %s223 = sadd.s32 %s221, %s222
      %s224 = smul.addr %s223, 8
      %s225 = scalar_lea.vmem %s0, %s224
      %s226 = smul.u32 2, %s22
      %p227 = scmp.lt.s32.totalorder %s20, 1
      %s228 = scalar_select %p227, %s20, 1
      %p229 = scmp.lt.s32.totalorder %s21, 0
      %s230 = scalar_select %p229, %s21, 0
      %p231 = scmp.lt.s32.totalorder %s226, 1
      %s232 = scalar_select %p231, %s226, 1
      %s233 = smul.addr %s230, 2
      %s234 = sadd.s32 %s232, %s233
      %s235 = smul.addr %s228, 2
      %s236 = sadd.s32 %s234, %s235
      %s237 = smul.addr %s236, 4
      %s238 = scalar_lea.vmem %s2, %s237
      %s239 = smul.u32 2, %s22
      %s240 = sadd.s32 %s21, %s22
      %p241 = scmp.lt.s32.totalorder %s20, 1
      %s242 = scalar_select %p241, %s20, 1
      %p243 = scmp.lt.s32.totalorder %s240, 0
      %s244 = scalar_select %p243, %s240, 0
      %s245 = sadd.s32 %s244, %s242
      %s246 = smul.addr %s245, 8
      %s247 = scalar_lea.vmem %s3, %s246
      %s248 = sadd.s32 %s21, %s22
      %s249 = smul.u32 %s22, 16
      %s250 = scalar_lea.vmem %s225, %s249
      %v251 = vld [vmem:[%s250] sm:$0xff]
      %v252 = vld [vmem:[%s250 + $0x8] sm:$0xff]
      %s253 = sadd.s32 %s249, 1
      %s254 = scalar_lea.vmem %s225, %s253
      %v255 = vld [vmem:[%s254] sm:$0xff]
      %v256 = vld [vmem:[%s254 + $0x8] sm:$0xff]
      %s257 = sadd.s32 %s249, 2
      %s258 = scalar_lea.vmem %s225, %s257
      %v259 = vld [vmem:[%s258] sm:$0xff]
      %v260 = vld [vmem:[%s258 + $0x8] sm:$0xff]
      %v261 = vpack.c.bf16 %v252, %v251
      %v262 = vpack.c.bf16 %v256, %v255
      %v263 = vpack.c.bf16 %v260, %v259
      %v264 = vld [vmem:[%s1] sm:$0xf]
      %v265 = vld [vmem:[%s1 + $0x4] sm:$0xf]
      %v266 = vld [vmem:[%s1 + $0x8] sm:$0xf]
      %v267 = vld [vmem:[%s1 + $0xc] sm:$0xf]
      %v268 = vld [vmem:[%s1 + $0x10] sm:$0xf]
      %v269 = vld [vmem:[%s1 + $0x14] sm:$0xf]
      %v270 = vld [vmem:[%s1 + $0x18] sm:$0xf]
      %v271 = vld [vmem:[%s1 + $0x1c] sm:$0xf]
      %v272 = vld [vmem:[%s1 + $0x20] sm:$0xf]
      %v273 = vld [vmem:[%s1 + $0x24] sm:$0xf]
      %v274 = vld [vmem:[%s1 + $0x28] sm:$0xf]
      %v275 = vld [vmem:[%s1 + $0x2c] sm:$0xf]
      %v276 = vld [vmem:[%s1 + $0x30] sm:$0xf]
      %v277 = vld [vmem:[%s1 + $0x34] sm:$0xf]
      %v278 = vld [vmem:[%s1 + $0x38] sm:$0xf]
      %v279 = vld [vmem:[%s1 + $0x3c] sm:$0xf]
      %v280 = vld [vmem:[%s1 + $0x40] sm:$0xf]
      %v281 = vld [vmem:[%s1 + $0x44] sm:$0xf]
      %v282 = vld [vmem:[%s1 + $0x48] sm:$0xf]
      %v283 = vld [vmem:[%s1 + $0x4c] sm:$0xf]
      %v284 = vld [vmem:[%s1 + $0x50] sm:$0xf]
      %v285 = vld [vmem:[%s1 + $0x54] sm:$0xf]
      %v286 = vld [vmem:[%s1 + $0x58] sm:$0xf]
      %v287 = vld [vmem:[%s1 + $0x5c] sm:$0xf]
      %v288 = vld [vmem:[%s1 + $0x60] sm:$0xf]
      %v289 = vld [vmem:[%s1 + $0x64] sm:$0xf]
      %v290 = vld [vmem:[%s1 + $0x68] sm:$0xf]
      %v291 = vld [vmem:[%s1 + $0x6c] sm:$0xf]
      %v292 = vld [vmem:[%s1 + $0x70] sm:$0xf]
      %v293 = vld [vmem:[%s1 + $0x74] sm:$0xf]
      %v294 = vld [vmem:[%s1 + $0x78] sm:$0xf]
      %v295 = vld [vmem:[%s1 + $0x7c] sm:$0xf]
      %v296 = vld [vmem:[%s1 + $0x80] sm:$0xf]
      %v297 = vld [vmem:[%s1 + $0x84] sm:$0xf]
      %v298 = vld [vmem:[%s1 + $0x88] sm:$0xf]
      %v299 = vld [vmem:[%s1 + $0x8c] sm:$0xf]
      %v300 = vld [vmem:[%s1 + $0x90] sm:$0xf]
      %v301 = vld [vmem:[%s1 + $0x94] sm:$0xf]
      %v302 = vld [vmem:[%s1 + $0x98] sm:$0xf]
      %v303 = vld [vmem:[%s1 + $0x9c] sm:$0xf]
      %v304 = vld [vmem:[%s1 + $0xa0] sm:$0xf]
      %v305 = vld [vmem:[%s1 + $0xa4] sm:$0xf]
      %v306 = vld [vmem:[%s1 + $0xa8] sm:$0xf]
      %v307 = vld [vmem:[%s1 + $0xac] sm:$0xf]
      %v308 = vld [vmem:[%s1 + $0xb0] sm:$0xf]
      %v309 = vld [vmem:[%s1 + $0xb4] sm:$0xf]
      %v310 = vld [vmem:[%s1 + $0xb8] sm:$0xf]
      %v311 = vld [vmem:[%s1 + $0xbc] sm:$0xf]
      %v360 = vunpack.c.l.b16 %v264
      %v361 = vunpack.c.l.b16 %v265
      %v362 = vunpack.c.l.b16 %v266
      %v363 = vunpack.c.l.b16 %v267
      %v364 = vunpack.c.l.b16 %v268
      %v365 = vunpack.c.l.b16 %v269
      %v366 = vunpack.c.l.b16 %v270
      %v367 = vunpack.c.l.b16 %v271
      %v368 = vunpack.c.l.b16 %v272
      %v369 = vunpack.c.l.b16 %v273
      %v370 = vunpack.c.l.b16 %v274
      %v371 = vunpack.c.l.b16 %v275
      %v372 = vunpack.c.l.b16 %v276
      %v373 = vunpack.c.l.b16 %v277
      %v374 = vunpack.c.l.b16 %v278
      %v375 = vunpack.c.l.b16 %v279
      %v376 = vunpack.c.l.b16 %v280
      %v377 = vunpack.c.l.b16 %v281
      %v378 = vunpack.c.l.b16 %v282
      %v379 = vunpack.c.l.b16 %v283
      %v380 = vunpack.c.l.b16 %v284
      %v381 = vunpack.c.l.b16 %v285
      %v382 = vunpack.c.l.b16 %v286
      %v383 = vunpack.c.l.b16 %v287
      %v384 = vunpack.c.l.b16 %v288
      %v385 = vunpack.c.l.b16 %v289
      %v386 = vunpack.c.l.b16 %v290
      %v387 = vunpack.c.l.b16 %v291
      %v388 = vunpack.c.l.b16 %v292
      %v389 = vunpack.c.l.b16 %v293
      %v390 = vunpack.c.l.b16 %v294
      %v391 = vunpack.c.l.b16 %v295
      %v392 = vunpack.c.l.b16 %v296
      %v393 = vunpack.c.l.b16 %v297
      %v394 = vunpack.c.l.b16 %v298
      %v395 = vunpack.c.l.b16 %v299
      %v396 = vunpack.c.l.b16 %v300
      %v397 = vunpack.c.l.b16 %v301
      %v398 = vunpack.c.l.b16 %v302
      %v399 = vunpack.c.l.b16 %v303
      %v400 = vunpack.c.l.b16 %v304
      %v401 = vunpack.c.l.b16 %v305
      %v402 = vunpack.c.l.b16 %v306
      %v403 = vunpack.c.l.b16 %v307
      %v404 = vunpack.c.l.b16 %v308
      %v405 = vunpack.c.l.b16 %v309
      %v406 = vunpack.c.l.b16 %v310
      %v407 = vunpack.c.l.b16 %v311
      %v408 = vpack.c.b16 %v361, %v360
      %v409 = vpack.c.b16 %v363, %v362
      %v410 = vpack.c.b16 %v365, %v364
      %v411 = vpack.c.b16 %v367, %v366
      %v412 = vpack.c.b16 %v369, %v368
      %v413 = vpack.c.b16 %v371, %v370
      %v414 = vpack.c.b16 %v373, %v372
      %v415 = vpack.c.b16 %v375, %v374
      %v416 = vpack.c.b16 %v377, %v376
      %v417 = vpack.c.b16 %v379, %v378
      %v418 = vpack.c.b16 %v381, %v380
      %v419 = vpack.c.b16 %v383, %v382
      %v420 = vpack.c.b16 %v385, %v384
      %v421 = vpack.c.b16 %v387, %v386
      %v422 = vpack.c.b16 %v389, %v388
      %v423 = vpack.c.b16 %v391, %v390
      %v424 = vpack.c.b16 %v393, %v392
      %v425 = vpack.c.b16 %v395, %v394
      %v426 = vpack.c.b16 %v397, %v396
      %v427 = vpack.c.b16 %v399, %v398
      %v428 = vpack.c.b16 %v401, %v400
      %v429 = vpack.c.b16 %v403, %v402
      %v430 = vpack.c.b16 %v405, %v404
      %v431 = vpack.c.b16 %v407, %v406
      %456 = vmatpush.bf16.msra.mxu0 %v415
      %457 = vmatpush.bf16.msra.mxu0 %v414
      %458 = vmatpush.bf16.msra.mxu0 %v413
      %459 = vmatpush.bf16.msra.mxu0 %v412
      %460 = vmatpush.bf16.msra.mxu0 %v411
      %461 = vmatpush.bf16.msra.mxu0 %v410
      %462 = vmatpush.bf16.msra.mxu0 %v409
      %463 = vmatpush.bf16.msra.mxu0 %v408
      %464 = vmatmul.bf16.gmra.mxu0 %v261
      %v465 = vpop.f32.mrf.mxu0
      %v466 = vadd.f32 0.0, %v465
      %v467 = vpop.f32.mrf.mxu0
      %v468 = vadd.f32 0.0, %v467
      %469 = vdwg.mxu0
      %470 = vmatpush.bf16.msra.mxu0 %v423
      %471 = vmatpush.bf16.msra.mxu0 %v422
      %472 = vmatpush.bf16.msra.mxu0 %v421
      %473 = vmatpush.bf16.msra.mxu0 %v420
      %474 = vmatpush.bf16.msra.mxu0 %v419
      %475 = vmatpush.bf16.msra.mxu0 %v418
      %476 = vmatpush.bf16.msra.mxu0 %v417
      %477 = vmatpush.bf16.msra.mxu0 %v416
      %478 = vmatmul.bf16.gmra.mxu0 %v262
      %v479 = vpop.f32.mrf.mxu0
      %v480 = vadd.f32 %v466, %v479
      %v481 = vpop.f32.mrf.mxu0
      %v482 = vadd.f32 %v468, %v481
      %483 = vdwg.mxu0
      %484 = vmatpush.bf16.msra.mxu0 %v431
      %485 = vmatpush.bf16.msra.mxu0 %v430
      %486 = vmatpush.bf16.msra.mxu0 %v429
      %487 = vmatpush.bf16.msra.mxu0 %v428
      %488 = vmatpush.bf16.msra.mxu0 %v427
      %489 = vmatpush.bf16.msra.mxu0 %v426
      %490 = vmatpush.bf16.msra.mxu0 %v425
      %491 = vmatpush.bf16.msra.mxu0 %v424
      %492 = vmatmul.bf16.gmra.mxu0 %v263
      %v493 = vpop.f32.mrf.mxu0
      %v494 = vadd.f32 %v480, %v493
      %v495 = vpop.f32.mrf.mxu0
      %v496 = vadd.f32 %v482, %v495
      %497 = vdwg.mxu0
      %v498 = vpack.c.bf16 %v494, %v494
      %v499 = vpack.c.bf16 %v496, %v496
      %500 = vst [vmem:[%s238] sm:$0xf] %v498
      %501 = vst [vmem:[%s238 + $0x4] sm:$0xf] %v499
      %v502 = vadd.f32 %v494, %v496
      %v503 = vrot.slane %v502, 4
      %v504 = vadd.f32 %v502, %v503
      %v505 = vrot.slane %v504, 2
      %v506 = vadd.f32 %v504, %v505
      %v507 = vrot.slane %v506, 1
      %v508 = vadd.f32 %v506, %v507
      %v509 = vmul.f32 %v494, %v494
      %v510 = vmul.f32 %v496, %v496
      %v511 = vadd.f32 %v509, %v510
      %v512 = vrot.slane %v511, 4
      %v513 = vadd.f32 %v511, %v512
      %v514 = vrot.slane %v513, 2
      %v515 = vadd.f32 %v513, %v514
      %v516 = vrot.slane %v515, 1
      %v517 = vadd.f32 %v515, %v516
      %vm518 = vcmask 1040384
      %v519 = vsel %vm518, %v508, %v517
      %vm520 = vcmask 1041408
      %v521 = vsel %vm520, %v519, 0.0
      %522 = vst [vmem:[%s247] sm:$0xff] %v521
      %s523 = smul.u32 2, %s22
      %p524 = scmp.lt.s32.totalorder %s20, 1
      %s525 = scalar_select %p524, %s20, 1
      %p526 = scmp.lt.s32.totalorder %s21, 0
      %s527 = scalar_select %p526, %s21, 0
      %p528 = scmp.lt.s32.totalorder %s523, 1
      %s529 = scalar_select %p528, %s523, 1
      %s530 = smul.addr %s527, 2
      %s531 = sadd.s32 %s529, %s530
      %s532 = smul.addr %s525, 2
      %s533 = sadd.s32 %s531, %s532
      %s534 = smul.addr %s533, 4
      %s535 = scalar_lea.vmem %s2, %s534
      %s536 = sadd.s32 %s21, %s22
      %p537 = scmp.lt.s32.totalorder %s20, 1
      %s538 = scalar_select %p537, %s20, 1
      %p539 = scmp.lt.s32.totalorder %s536, 0
      %s540 = scalar_select %p539, %s536, 0
      %s541 = sadd.s32 %s540, %s538
      %s542 = smul.addr %s541, 8
      %s543 = scalar_lea.vmem %s3, %s542
      // Predicated region
      $region29: #{basic_conv_forward.2} parent=27 // pred_check
        %p544 = pneg %p105
      $region30: #{basic_conv_forward.2} parent=27 // pred_check_branch
        %546 = sbr.rel (%p544) target = $region32
      $region31: #{basic_conv_forward.2} parent=27 // pred_region
        %s547 = smul.u32 2, %s22
      $region32: #{basic_conv_forward.2} parent=27 // pred_fallthru
        _
      // Predicated region
      $region33: #{basic_conv_forward.2} parent=27 // pred_check
        %p548 = pneg %p135
      $region34: #{basic_conv_forward.2} parent=27 // pred_check_branch
        %550 = sbr.rel (%p548) target = $region36
      $region35: #{basic_conv_forward.2} parent=27 // pred_region
        %s551 = sadd.s32 %s21, %s22
      $region36: #{basic_conv_forward.2} parent=27 // pred_fallthru
        _
    $region28: #{basic_conv_forward.2} parent=5 // pred_fallthru
      _
    %p552 = scmp.le.s32.totalorder 2, %s10
    // Predicated region
    $region37: #{basic_conv_forward.2} parent=5 // pred_check
      %p553 = pneg %p552
    $region38: #{basic_conv_forward.2} parent=5 // pred_check_branch
      %555 = sbr.rel (%p553) target = $region40
    $region39: #{basic_conv_forward.2} parent=5 // pred_region
      %s556 = ssub.s32 %s10, 2
      // Predicated region
      $region41: #{basic_conv_forward.2} parent=39 // pred_check
        %p557 = pneg %p111
      $region42: #{basic_conv_forward.2} parent=39 // pred_check_branch
        %559 = sbr.rel (%p557) target = $region44
      $region43: #{basic_conv_forward.2} parent=39 // pred_region
        %s560 = smul.u32 2, %s25
        %p561 = scmp.lt.s32.totalorder %s23, 1
        %s562 = scalar_select %p561, %s23, 1
        %p563 = scmp.lt.s32.totalorder %s24, 0
        %s564 = scalar_select %p563, %s24, 0
        %p565 = scmp.lt.s32.totalorder %s560, 1
        %s566 = scalar_select %p565, %s560, 1
        %s567 = smul.addr %s564, 2
        %s568 = sadd.s32 %s566, %s567
        %s569 = smul.addr %s562, 2
        %s570 = sadd.s32 %s568, %s569
        %s571 = smul.addr %s570, 4
        %s572 = scalar_lea.vmem %s2, %s571
      $region44: #{basic_conv_forward.2} parent=39 // pred_fallthru
        _
      // Predicated region
      $region45: #{basic_conv_forward.2} parent=39 // pred_check
        %p573 = pneg %p141
      $region46: #{basic_conv_forward.2} parent=39 // pred_check_branch
        %575 = sbr.rel (%p573) target = $region48
      $region47: #{basic_conv_forward.2} parent=39 // pred_region
        %s576 = sadd.s32 %s24, %s25
        %p577 = scmp.lt.s32.totalorder %s23, 1
        %s578 = scalar_select %p577, %s23, 1
        %p579 = scmp.lt.s32.totalorder %s576, 0
        %s580 = scalar_select %p579, %s576, 0
        %s581 = sadd.s32 %s580, %s578
        %s582 = smul.addr %s581, 8
        %s583 = scalar_lea.vmem %s3, %s582
      $region48: #{basic_conv_forward.2} parent=39 // pred_fallthru
        _
    $region40: #{basic_conv_forward.2} parent=5 // pred_fallthru
      _
  $region6: #{basic_conv_forward.2} parent=0 // loop_footer
    %s14 = sadd.s32 1, %s10
  $region7: #{basic_conv_forward.2} parent=0 // loop_footer_branch
    %9 = sbr.rel target = $region3
  $region8: #{basic_conv_forward.2} parent=0 // loop_exit
    _

// kernel: basic_conv_forward.3
$region0: #{basic_conv_forward.3}
  #allocation0 [shape = 'u32[]', space=smem, size = 0x4, offset = 0x4, fixed_abs, tag = 'smem constant byte address 0x4 - core index']
  #allocation1 [shape = 'u32[72,128]{1,0:T(1,128)}', space=vmem, size = 0x9000, scoped, tag = 'internal scratch']
  %s0 = inlined_call_operand.vmem [shape: bf16[2,1,16,128], index: 0, kind: input, shape index: {}, may-alias: {0,3}]
  %s1 = inlined_call_operand.vmem [shape: f32[1,128], index: 1, kind: input, shape index: {}]
  %s2 = inlined_call_operand.vmem [shape: f32[1,128], index: 2, kind: input, shape index: {}]
  %s3 = inlined_call_operand.vmem [shape: bf16[2,1,16,128], index: 3, kind: output, shape index: {}, may-alias: {0,3}]
  %s4 = sld [smem:[#allocation0]]
  $region45: #{basic_conv_forward.3} parent=0
    _
  %s6 = ssub.s32 1, %s4
  %s7 = scalar_select 0, %s6, %s4
  loop: start=0, step=1, limit=4
  $region2: #{basic_conv_forward.3} parent=0 // loop_pre_header
    _
  $region3: #{basic_conv_forward.3} parent=0 // loop_header
    %s9 = sphi 0, %s13
    %p10 = scmp.ge.s32.totalorder %s9, 4
    %s16 = sphi 0, %s28
    %s17 = sphi 0, %s24
    %s18 = sphi 0, %s16
    %s19 = sphi 0, %s17
    %s20 = sphi 0, %s18
    %s21 = sphi 0, %s19
    %s33 = sphi 0, %s35
    %s36 = sphi 0, %s33
    %s37 = sphi 0, %s36
    %s53 = sphi 0, %s37
    %s57 = sphi 0, %s57
    %s59 = sphi 0, %s57
    %s60 = sphi 0, %s59
    %s74 = sphi 0, %s60
    %s78 = sphi 0, %s78
    %s80 = sphi 0, %s78
    %s81 = sphi 0, %s80
    %s95 = sphi 0, %s81
    %s103 = sphi 0, %s105
    %s106 = sphi 0, %s103
    %s107 = sphi 0, %s106
    %s123 = sphi 0, %s107
  $region4: #{basic_conv_forward.3} parent=0 // loop_header_branch
    %12 = sbr.rel (%p10) target = $region8
  $region5: #{basic_conv_forward.3} parent=0 // loop_body
    %s14 = ssub.s32 %s9, 1
    %s15 = ssub.s32 %s9, 2
    %s22 = sadd.s32 1, %s17
    %p23 = scmp.ge.s32.totalorder %s22, 1
    %s24 = scalar_select %p23, 0, %s22
    %s25 = sadd.s32 1, %s16
    %s26 = scalar_select %p23, %s25, %s16
    %p27 = scmp.ge.s32.totalorder %s26, 2
    %s28 = scalar_select %p27, 0, %s26
    %s29 = ssub.s32 %s16, %s28
    %s30 = ssub.s32 %s17, %s24
    %s31 = sor.u32 %s29, %s30
    %p32 = scmp.eq.s32.totalorder %s31, 0
    %s34 = sadd.s32 %s33, 1
    %s35 = scalar_select %p32, %s33, %s34
    %p38 = pneg %p32
    %p39 = scmp.eq.s32.totalorder %s9, 1
    %p40 = por %p38, %p39
    %p41 = scmp.ne.s32.totalorder %s33, %s36
    %p42 = scmp.eq.s32.totalorder %s9, 0
    %p43 = por %p41, %p42
    %p44 = scmp.ne.s32.totalorder %s33, %s36
    %p45 = scmp.eq.s32.totalorder %s14, 1
    %p46 = por %p44, %p45
    %p47 = scmp.ne.s32.totalorder %s36, %s37
    %p48 = scmp.eq.s32.totalorder %s14, 0
    %p49 = por %p47, %p48
    %p50 = scmp.ne.s32.totalorder %s36, %s37
    %p51 = scmp.eq.s32.totalorder %s15, 1
    %p52 = por %p50, %p51
    %p54 = scmp.ne.s32.totalorder %s37, %s53
    %p55 = scmp.eq.s32.totalorder %s15, 0
    %p56 = por %p54, %p55
    %s58 = sadd.s32 %s57, 1
    %p61 = scmp.eq.s32.totalorder %s9, 1
    %p62 = scmp.ne.s32.totalorder %s57, %s59
    %p63 = scmp.eq.s32.totalorder %s9, 0
    %p64 = por %p62, %p63
    %p65 = scmp.ne.s32.totalorder %s57, %s59
    %p66 = scmp.eq.s32.totalorder %s14, 1
    %p67 = por %p65, %p66
    %p68 = scmp.ne.s32.totalorder %s59, %s60
    %p69 = scmp.eq.s32.totalorder %s14, 0
    %p70 = por %p68, %p69
    %p71 = scmp.ne.s32.totalorder %s59, %s60
    %p72 = scmp.eq.s32.totalorder %s15, 1
    %p73 = por %p71, %p72
    %p75 = scmp.ne.s32.totalorder %s60, %s74
    %p76 = scmp.eq.s32.totalorder %s15, 0
    %p77 = por %p75, %p76
    %s79 = sadd.s32 %s78, 1
    %p82 = scmp.eq.s32.totalorder %s9, 1
    %p83 = scmp.ne.s32.totalorder %s78, %s80
    %p84 = scmp.eq.s32.totalorder %s9, 0
    %p85 = por %p83, %p84
    %p86 = scmp.ne.s32.totalorder %s78, %s80
    %p87 = scmp.eq.s32.totalorder %s14, 1
    %p88 = por %p86, %p87
    %p89 = scmp.ne.s32.totalorder %s80, %s81
    %p90 = scmp.eq.s32.totalorder %s14, 0
    %p91 = por %p89, %p90
    %p92 = scmp.ne.s32.totalorder %s80, %s81
    %p93 = scmp.eq.s32.totalorder %s15, 1
    %p94 = por %p92, %p93
    %p96 = scmp.ne.s32.totalorder %s81, %s95
    %p97 = scmp.eq.s32.totalorder %s15, 0
    %p98 = por %p96, %p97
    %s99 = ssub.s32 %s16, %s28
    %s100 = ssub.s32 %s17, %s24
    %s101 = sor.u32 %s99, %s100
    %p102 = scmp.eq.s32.totalorder %s101, 0
    %s104 = sadd.s32 %s103, 1
    %s105 = scalar_select %p102, %s103, %s104
    %p108 = pneg %p102
    %p109 = scmp.eq.s32.totalorder %s9, 1
    %p110 = por %p108, %p109
    %p111 = scmp.ne.s32.totalorder %s103, %s106
    %p112 = scmp.eq.s32.totalorder %s9, 0
    %p113 = por %p111, %p112
    %p114 = scmp.ne.s32.totalorder %s103, %s106
    %p115 = scmp.eq.s32.totalorder %s14, 1
    %p116 = por %p114, %p115
    %p117 = scmp.ne.s32.totalorder %s106, %s107
    %p118 = scmp.eq.s32.totalorder %s14, 0
    %p119 = por %p117, %p118
    %p120 = scmp.ne.s32.totalorder %s106, %s107
    %p121 = scmp.eq.s32.totalorder %s15, 1
    %p122 = por %p120, %p121
    %p124 = scmp.ne.s32.totalorder %s107, %s123
    %p125 = scmp.eq.s32.totalorder %s15, 0
    %p126 = por %p124, %p125
    %p127 = scmp.le.s32.totalorder 1, %s9
    %p128 = scmp.lt.s32.totalorder %s9, 3
    %p129 = pnand %p127, %p128
    %p130 = pneg %p129
    // Predicated region
    $region9: #{basic_conv_forward.3} parent=5 // pred_check
      _
    $region10: #{basic_conv_forward.3} parent=5 // pred_check_branch
      %132 = sbr.rel (%p129) target = $region12
    $region11: #{basic_conv_forward.3} parent=5 // pred_region
      %s133 = ssub.s32 %s9, 1
      // Predicated region
      $region13: #{basic_conv_forward.3} parent=11 // pred_check
        %p134 = pneg %p70
      $region14: #{basic_conv_forward.3} parent=11 // pred_check_branch
        %136 = sbr.rel (%p134) target = $region16
      $region15: #{basic_conv_forward.3} parent=11 // pred_region
        _
      $region16: #{basic_conv_forward.3} parent=11 // pred_fallthru
        _
      // Predicated region
      $region17: #{basic_conv_forward.3} parent=11 // pred_check
        %p137 = pneg %p91
      $region18: #{basic_conv_forward.3} parent=11 // pred_check_branch
        %139 = sbr.rel (%p137) target = $region20
      $region19: #{basic_conv_forward.3} parent=11 // pred_region
        _
      $region20: #{basic_conv_forward.3} parent=11 // pred_fallthru
        _
    $region12: #{basic_conv_forward.3} parent=5 // pred_fallthru
      _
    %p140 = scmp.lt.s32.totalorder %s9, 2
    // Predicated region
    $region21: #{basic_conv_forward.3} parent=5 // pred_check
      %p141 = pneg %p140
    $region22: #{basic_conv_forward.3} parent=5 // pred_check_branch
      %143 = sbr.rel (%p141) target = $region24
    $region23: #{basic_conv_forward.3} parent=5 // pred_region
      // Predicated region
      $region25: #{basic_conv_forward.3} parent=23 // pred_check
        %p144 = pneg %p43
      $region26: #{basic_conv_forward.3} parent=23 // pred_check_branch
        %146 = sbr.rel (%p144) target = $region28
      $region27: #{basic_conv_forward.3} parent=23 // pred_region
        %p147 = scmp.lt.s32.totalorder %s16, 1
        %s148 = scalar_select %p147, %s16, 1
        %p149 = scmp.lt.s32.totalorder %s17, 0
        %s150 = scalar_select %p149, %s17, 0
        %s151 = smul.addr %s150, 2
        %s152 = smul.addr %s148, 2
        %s153 = sadd.s32 %s151, %s152
        %s154 = smul.addr %s153, 4
        %s155 = scalar_lea.vmem %s0, %s154
      $region28: #{basic_conv_forward.3} parent=23 // pred_fallthru
        _
    $region24: #{basic_conv_forward.3} parent=5 // pred_fallthru
      _
    %p156 = scmp.le.s32.totalorder 1, %s9
    %p157 = scmp.lt.s32.totalorder %s9, 3
    %p158 = pnand %p156, %p157
    %p159 = pneg %p158
    // Predicated region
    $region29: #{basic_conv_forward.3} parent=5 // pred_check
      _
    $region30: #{basic_conv_forward.3} parent=5 // pred_check_branch
      %161 = sbr.rel (%p158) target = $region32
    $region31: #{basic_conv_forward.3} parent=5 // pred_region
      %s162 = ssub.s32 %s9, 1
      %p163 = scmp.lt.s32.totalorder %s18, 1
      %s164 = scalar_select %p163, %s18, 1
      %p165 = scmp.lt.s32.totalorder %s19, 0
      %s166 = scalar_select %p165, %s19, 0
      %s167 = smul.addr %s166, 2
      %s168 = smul.addr %s164, 2
      %s169 = sadd.s32 %s167, %s168
      %s170 = smul.addr %s169, 4
      %s171 = scalar_lea.vmem %s0, %s170
      %p172 = pneg %p49
      %p173 = pneg %p46
      %p174 = pneg %p70
      %p175 = pneg %p67
      %p176 = pneg %p91
      %p177 = pneg %p88
      %p178 = pneg %p119
      %p179 = pneg %p116
      %p180 = scmp.lt.s32.totalorder %s18, 1
      %s181 = scalar_select %p180, %s18, 1
      %p182 = scmp.lt.s32.totalorder %s19, 0
      %s183 = scalar_select %p182, %s19, 0
      %s184 = smul.addr %s183, 2
      %s185 = smul.addr %s181, 2
      %s186 = sadd.s32 %s184, %s185
      %s187 = smul.addr %s186, 4
      %s188 = scalar_lea.vmem %s3, %s187
      %p189 = scmp.lt.s32.totalorder %s18, 1
      %s190 = scalar_select %p189, %s18, 1
      %p191 = scmp.lt.s32.totalorder %s19, 0
      %s192 = scalar_select %p191, %s19, 0
      %s193 = smul.addr %s192, 2
      %s194 = smul.addr %s190, 2
      %s195 = sadd.s32 %s193, %s194
      %s196 = smul.addr %s195, 4
      %s197 = scalar_lea.vmem %s0, %s196
      %p198 = scmp.lt.s32.totalorder %s18, 1
      %s199 = scalar_select %p198, %s18, 1
      %p200 = scmp.lt.s32.totalorder %s19, 0
      %s201 = scalar_select %p200, %s19, 0
      %s202 = smul.addr %s201, 2
      %s203 = smul.addr %s199, 2
      %s204 = sadd.s32 %s202, %s203
      %s205 = smul.addr %s204, 4
      %s206 = scalar_lea.vmem %s3, %s205
      %v207 = vld [vmem:[%s197] sm:$0xf]
      %v208 = vld [vmem:[%s197 + $0x4] sm:$0xf]
      %v209 = vunpack.c.l.bf16 %v207
      %v210 = vunpack.c.l.bf16 %v208
      %v211 = vld [vmem:[%s1] sm:$0x1]
      %v213 = vperm.slane %v211, 0
      %v215 = vmul.f32 %v209, %v213
      %v216 = vmul.f32 %v210, %v213
      %v217 = vld [vmem:[%s2] sm:$0x1]
      %v219 = vperm.slane %v217, 0
      %v221 = vadd.f32 %v215, %v219
      %v222 = vadd.f32 %v216, %v219
      %v223 = vmax.f32 %v221, 0.0
      %v224 = vmax.f32 %v222, 0.0
      %v225 = vpack.c.bf16 %v223, %v223
      %v226 = vpack.c.bf16 %v224, %v224
      %227 = vst [vmem:[%s206] sm:$0xf] %v225
      %228 = vst [vmem:[%s206 + $0x4] sm:$0xf] %v226
      %p229 = scmp.lt.s32.totalorder %s18, 1
      %s230 = scalar_select %p229, %s18, 1
      %p231 = scmp.lt.s32.totalorder %s19, 0
      %s232 = scalar_select %p231, %s19, 0
      %s233 = smul.addr %s232, 2
      %s234 = smul.addr %s230, 2
      %s235 = sadd.s32 %s233, %s234
      %s236 = smul.addr %s235, 4
      %s237 = scalar_lea.vmem %s3, %s236
      // Predicated region
      $region33: #{basic_conv_forward.3} parent=31 // pred_check
        %p238 = pneg %p116
      $region34: #{basic_conv_forward.3} parent=31 // pred_check_branch
        %240 = sbr.rel (%p238) target = $region36
      $region35: #{basic_conv_forward.3} parent=31 // pred_region
        _
      $region36: #{basic_conv_forward.3} parent=31 // pred_fallthru
        _
    $region32: #{basic_conv_forward.3} parent=5 // pred_fallthru
      _
    %p241 = scmp.le.s32.totalorder 2, %s9
    // Predicated region
    $region37: #{basic_conv_forward.3} parent=5 // pred_check
      %p242 = pneg %p241
    $region38: #{basic_conv_forward.3} parent=5 // pred_check_branch
      %244 = sbr.rel (%p242) target = $region40
    $region39: #{basic_conv_forward.3} parent=5 // pred_region
      %s245 = ssub.s32 %s9, 2
      // Predicated region
      $region41: #{basic_conv_forward.3} parent=39 // pred_check
        %p246 = pneg %p122
      $region42: #{basic_conv_forward.3} parent=39 // pred_check_branch
        %248 = sbr.rel (%p246) target = $region44
      $region43: #{basic_conv_forward.3} parent=39 // pred_region
        %p249 = scmp.lt.s32.totalorder %s20, 1
        %s250 = scalar_select %p249, %s20, 1
        %p251 = scmp.lt.s32.totalorder %s21, 0
        %s252 = scalar_select %p251, %s21, 0
        %s253 = smul.addr %s252, 2
        %s254 = smul.addr %s250, 2
        %s255 = sadd.s32 %s253, %s254
        %s256 = smul.addr %s255, 4
        %s257 = scalar_lea.vmem %s3, %s256
      $region44: #{basic_conv_forward.3} parent=39 // pred_fallthru
        _
    $region40: #{basic_conv_forward.3} parent=5 // pred_fallthru
      _
  $region6: #{basic_conv_forward.3} parent=0 // loop_footer
    %s13 = sadd.s32 1, %s9
  $region7: #{basic_conv_forward.3} parent=0 // loop_footer_branch
    %8 = sbr.rel target = $region3
  $region8: #{basic_conv_forward.3} parent=0 // loop_exit
    _

</llo_original>
